<compile_context>
chip_gen: v5e
topology: v5e:2x2
jax: 0.10.0
libtpu: 0.0.40
codegen_flags: <defaults>
</compile_context>

<pallas_src>
import functools

import numpy as np
import jax
import jax.numpy as jnp
from jax import lax
from jax.experimental import pallas as pl
from jax.experimental.pallas import tpu as pltpu

BN_EPS = 1e-5
_VMEM_LIMIT = 32 * 1024 * 1024    # explicit scoped-VMEM cap (safe on v5e/v6e/v7x)
_VMEM_BUDGET = 24 * 1024 * 1024   # what tile selection may consume (headroom kept)


def _round_up(x, m):
    return (x + m - 1) // m * m


def _choose_tm(m, k_pad, tc):
    """Largest pass-1 M-tile (multiple of 8) whose pipeline buffers fit the budget."""
    fixed = 2 * k_pad * tc * 2 + 4 * tc * 8          # dbl-buffered bf16 weights + stats
    per_row = 2 * k_pad * 2 + 2 * tc * 2 + tc * 4    # bf16 patches(x2) + bf16 y(x2) + f32 acc
    tm = 1024
    while tm > 8 and fixed + tm * per_row > _VMEM_BUDGET:
        tm //= 2
    tm = max(tm, 8)
    tm = min(tm, _round_up(m, 8))
    # Avoid paying >25% of the GEMM on zero-padded rows.
    while tm > 256 and _round_up(m, tm) - m > m // 4:
        tm //= 2
    return tm


def _choose_tm2(m_pad, tm, tc):
    """Pass-2 M tile: largest power-of-two multiple of tm dividing m_pad within budget."""
    cap_rows = max(_VMEM_BUDGET // (12 * tc), 8)     # bf16 in (x2) + f32 out (x2)
    nm = m_pad // tm
    d = 1
    while d * 2 <= nm and nm % (d * 2) == 0 and d * 2 * tm <= cap_rows:
        d *= 2
    return d * tm


# --------------------------- pass 1: conv + stats ----------------------------
def _conv_stats_kernel(p_ref, w_ref, y_ref, stats_ref):
    """Tiled im2col matmul; accumulates per-channel sum / sum-of-squares.

    p_ref:     [TM, Kpad]  bf16 patch tile
    w_ref:     [Kpad, TC]  bf16 weight tile (resident across the M sweep)
    y_ref:     [TM, TC]    bf16 conv output tile (f32 MXU accumulation)
    stats_ref: [2,  TC]    f32 accumulator (row 0: sum, row 1: sum of squares),
                           VMEM-resident across the "arbitrary" M grid axis.
    """
    @pl.when(pl.program_id(1) == 0)
    def _():
        stats_ref[...] = jnp.zeros_like(stats_ref)

    y = jnp.dot(p_ref[...], w_ref[...], preferred_element_type=jnp.float32)
    y_ref[...] = y.astype(y_ref.dtype)

    stats_ref[...] += jnp.concatenate(
        [jnp.sum(y, axis=0, keepdims=True),
         jnp.sum(y * y, axis=0, keepdims=True)], axis=0)


# ------------------------- pass 2: fused BN + ReLU ----------------------------
def _bn_relu_kernel(y_ref, scale_ref, shift_ref, o_ref):
    """o = max(y * scale + shift, 0) with per-channel (folded BN) scale/shift."""
    y = y_ref[...].astype(jnp.float32)
    o_ref[...] = jnp.maximum(y * scale_ref[...] + shift_ref[...], 0.0)


def _convblock_pallas(patches, w2d, gamma, beta):
    """patches: [M, Kpad] bf16; w2d: [Kpad, Cpad] bf16; gamma/beta: [1, Cpad] f32.
    Returns the BN+ReLU'd conv output [M, Cpad] f32."""
    m, k_pad = patches.shape
    c_pad = w2d.shape[1]

    tc = 256 if c_pad % 256 == 0 else 128
    tm = _choose_tm(m, k_pad, tc)
    m_pad = _round_up(m, tm)
    if m_pad != m:
        # Zero rows contribute nothing to the channel sums.
        patches = jnp.pad(patches, ((0, m_pad - m), (0, 0)))

    nc = c_pad // tc
    nm = m_pad // tm

    # TODO(synk): when nc > 1 the patch array is streamed nc times; a scratch-based
    # channel accumulator with the M axis outermost would read it once, at the cost
    # of losing the channel-parallel megacore split on v7x.
    y, stats = pl.pallas_call(
        _conv_stats_kernel,
        out_shape=(
            jax.ShapeDtypeStruct((m_pad, c_pad), jnp.bfloat16),
            jax.ShapeDtypeStruct((2, c_pad), jnp.float32),
        ),
        grid=(nc, nm),
        in_specs=[
            pl.BlockSpec((tm, k_pad), lambda c, i: (i, 0)),
            pl.BlockSpec((k_pad, tc), lambda c, i: (0, c)),
        ],
        out_specs=(
            pl.BlockSpec((tm, tc), lambda c, i: (i, c)),
            pl.BlockSpec((2, tc), lambda c, i: (0, c)),
        ),
        compiler_params=pltpu.CompilerParams(
            dimension_semantics=("parallel", "arbitrary"),
            vmem_limit_bytes=_VMEM_LIMIT,
        ),
    )(patches, w2d)

    # Fold BN (training-mode batch stats, biased variance) into per-channel
    # scale/shift on a tiny [Cpad] array. Padded rows/channels are all-zero and
    # therefore harmless; divide by the true element count.
    count = jnp.float32(m)
    mean = stats[0] / count
    var = jnp.maximum(stats[1] / count - mean * mean, 0.0)
    inv_std = lax.rsqrt(var + BN_EPS)
    scale_vec = gamma[0] * inv_std
    shift_vec = beta[0] - mean * scale_vec
    scale = scale_vec[None, :]
    shift = shift_vec[None, :]

    tm2 = _choose_tm2(m_pad, tm, tc)
    nm2 = m_pad // tm2

    out = pl.pallas_call(
        _bn_relu_kernel,
        out_shape=jax.ShapeDtypeStruct((m_pad, c_pad), jnp.float32),
        grid=(nc, nm2),
        in_specs=[
            pl.BlockSpec((tm2, tc), lambda c, i: (i, c)),
            pl.BlockSpec((1, tc), lambda c, i: (0, c)),
            pl.BlockSpec((1, tc), lambda c, i: (0, c)),
        ],
        out_specs=pl.BlockSpec((tm2, tc), lambda c, i: (i, c)),
        compiler_params=pltpu.CompilerParams(
            dimension_semantics=("parallel", "parallel"),
            vmem_limit_bytes=_VMEM_LIMIT,
        ),
    )(y, scale, shift)

    return out[:m]


# ------------------------------ JAX glue --------------------------------------
def _im2col(x, kh, kw, stride, padding, dilation):
    """x: [N, Cin, H, W] -> patches [N*OH*OW, Cin*KH*KW] (same dtype), plus (OH, OW)."""
    # TODO(synk): build the KH*KW shifted views inside the kernel (manual DMA of
    # NHWC input row-bands) to avoid the ~KH*KW HBM blow-up of materialized patches.
    n, cin, h, w = x.shape
    oh = (h + 2 * padding - dilation * (kh - 1) - 1) // stride + 1
    ow = (w + 2 * padding - dilation * (kw - 1) - 1) // stride + 1
    xp = jnp.pad(x, ((0, 0), (0, 0), (padding, padding), (padding, padding)))
    cols = []
    for i in range(kh):
        for j in range(kw):
            hs = i * dilation
            ws = j * dilation
            sl = xp[:, :, hs:hs + (oh - 1) * stride + 1:stride,
                        ws:ws + (ow - 1) * stride + 1:stride]  # [N,Cin,OH,OW]
            cols.append(sl)
    # [N, Cin, KH*KW, OH, OW] -> [N, OH, OW, Cin, KH*KW] -> [M, K]
    patches = jnp.stack(cols, axis=2)
    patches = patches.transpose(0, 3, 4, 1, 2).reshape(n * oh * ow, cin * kh * kw)
    return patches, oh, ow


def _forward(x, weight, gamma, beta, *, kh, kw, stride, padding, dilation,
             out_channels):
    n = x.shape[0]
    # bf16 GEMM operands (f32 accumulation inside the kernel) -> half the HBM
    # traffic for the patch array and full bf16 MXU rate.
    xb = x.astype(jnp.bfloat16)
    patches, oh, ow = _im2col(xb, kh, kw, stride, padding, dilation)
    k = patches.shape[1]
    k_pad = _round_up(k, 128)
    c_pad = _round_up(out_channels, 128)

    if k_pad != k:
        patches = jnp.pad(patches, ((0, 0), (0, k_pad - k)))

    w2d = weight.reshape(out_channels, -1).T.astype(jnp.bfloat16)
    w2d = jnp.pad(w2d, ((0, k_pad - k), (0, c_pad - out_channels)))

    gamma_p = jnp.pad(gamma, (0, c_pad - out_channels)).reshape(1, -1)
    beta_p = jnp.pad(beta, (0, c_pad - out_channels)).reshape(1, -1)

    out2d = _convblock_pallas(patches, w2d, gamma_p, beta_p)  # [M, Cpad] f32
    out = out2d[:, :out_channels].reshape(n, oh, ow, out_channels)
    # TODO(synk): return NHWC (or fuse this transpose into the consumer) to
    # save an HBM round-trip; NCHW kept here to match the PyTorch module.
    return out.transpose(0, 3, 1, 2)


class ConvBlockPallas:
    """JAX/Pallas equivalent of torchsegmentor ConvBlock (Conv2d+BN+ReLU, training-mode BN)."""

    def __init__(self, in_channels, out_channels, kernel_size, stride=1,
                 padding=0, dilation=1, groups=1, bias=True,
                 key=jax.random.PRNGKey(0)):
        assert groups == 1, "groups != 1 not supported"
        self.in_channels = in_channels
        self.out_channels = out_channels
        self.kh = self.kw = kernel_size
        self.stride = stride
        self.padding = padding
        self.dilation = dilation

        # kaiming_normal_(weight, a=1): gain = sqrt(2/(1+a^2)) = 1,
        # std = gain / sqrt(fan_in), fan_in = Cin*KH*KW
        fan_in = in_channels * self.kh * self.kw
        std = 1.0 / np.sqrt(fan_in)
        self.weight = std * jax.random.normal(
            key, (out_channels, in_channels, self.kh, self.kw), dtype=jnp.float32)
        # nn.init.constant_(bias, 0). Note: a per-channel conv bias is exactly
        # cancelled by BN's mean subtraction, so it is not fed to the kernel.
        self.bias = jnp.zeros((out_channels,), jnp.float32)
        # BatchNorm2d default affine params.
        self.gamma = jnp.ones((out_channels,), jnp.float32)
        self.beta = jnp.zeros((out_channels,), jnp.float32)

        # One jitted program: im2col + both pallas_calls + epilogue fuse together.
        self._fwd = jax.jit(functools.partial(
            _forward, kh=self.kh, kw=self.kw, stride=self.stride,
            padding=self.padding, dilation=self.dilation,
            out_channels=self.out_channels))

    def __call__(self, x):
        # x: [N, Cin, H, W] (NCHW, matching PyTorch)
        return self._fwd(x, self.weight, self.gamma, self.beta)


# ------------------------------ reference -------------------------------------
def _reference(x, weight, bias, gamma, beta, stride, padding, dilation):
    y = lax.conv_general_dilated(
        x.astype(jnp.float32), weight,
        window_strides=(stride, stride),
        padding=[(padding, padding), (padding, padding)],
        rhs_dilation=(dilation, dilation),
        dimension_numbers=("NCHW", "OIHW", "NCHW"),
    ) + bias.reshape(1, -1, 1, 1)
    mean = jnp.mean(y, axis=(0, 2, 3), keepdims=True)
    var = jnp.mean((y - mean) ** 2, axis=(0, 2, 3), keepdims=True)
    y = (y - mean) * lax.rsqrt(var + BN_EPS)
    y = y * gamma.reshape(1, -1, 1, 1) + beta.reshape(1, -1, 1, 1)
    return jnp.maximum(y, 0.0)


if __name__ == "__main__":
    key = jax.random.PRNGKey(0)
    k_x, k_w = jax.random.split(key)

    N, Cin, H, W = 2, 4, 16, 16
    Cout, ksize, stride, padding = 8, 3, 1, 1

    x = jax.random.normal(k_x, (N, Cin, H, W), dtype=jnp.float32)

    block = ConvBlockPallas(Cin, Cout, ksize, stride=stride, padding=padding, key=k_w)
    out = jax.block_until_ready(block(x))

    ref = _reference(x, block.weight, block.bias, block.gamma, block.beta,
                     stride, padding, 1)
    # bf16 MXU operands + bf16 conv intermediate -> compare at bf16 tolerance.
    np.testing.assert_allclose(np.asarray(out), np.asarray(ref),
                               rtol=2e-2, atol=2e-2)

    print("KERNEL_OK")
</pallas_src>

<mosaic_0001>
module attributes {stable_mosaic.version = 11 : i64} {
  func.func @_conv_stats_kernel(%arg0: i32, %arg1: i32, %arg2: memref<512x128xbf16, #tpu.memory_space<vmem>>, %arg3: memref<128x128xbf16, #tpu.memory_space<vmem>>, %arg4: memref<512x128xbf16, #tpu.memory_space<vmem>>, %arg5: memref<2x128xf32, #tpu.memory_space<vmem>>) attributes {dimension_semantics = [#tpu.dimension_semantics<parallel>, #tpu.dimension_semantics<arbitrary>], iteration_bounds = array<i64: 1, 1>, scalar_prefetch = 0 : i64, scratch_operands = 0 : i64, tpu.core_type = #tpu.core_type<tc>, window_params = [{transform_indices = @transform_0, window_bounds = array<i64: 512, 128>}, {transform_indices = @transform_1, window_bounds = array<i64: 128, 128>}, {transform_indices = @transform_2, window_bounds = array<i64: 512, 128>}, {transform_indices = @transform_3, window_bounds = array<i64: 2, 128>}]} {
    %c0_i32 = arith.constant 0 : i32
    %0 = arith.cmpi eq, %arg1, %c0_i32 : i32
    %1 = arith.extui %0 : i1 to i32
    %c0_i32_0 = arith.constant 0 : i32
    %2 = arith.cmpi ne, %1, %c0_i32_0 : i32
    scf.if %2 {
      %cst_12 = arith.constant 0.000000e+00 : f32
      %17 = vector.broadcast %cst_12 : f32 to vector<2x128xf32>
      %c0_13 = arith.constant 0 : index
      %c0_14 = arith.constant 0 : index
      %18 = vector.load %arg5[%c0_13, %c0_14] : memref<2x128xf32, #tpu.memory_space<vmem>>, vector<2x128xf32>
      tpu.vector_store %arg5[%c0_13, %c0_14], %17 {strides = array<i32>} : memref<2x128xf32, #tpu.memory_space<vmem>>, vector<2x128xf32>,
    } else {
    }
    %c0 = arith.constant 0 : index
    %c0_1 = arith.constant 0 : index
    %3 = vector.load %arg2[%c0, %c0_1] : memref<512x128xbf16, #tpu.memory_space<vmem>>, vector<512x128xbf16>
    %c0_2 = arith.constant 0 : index
    %c0_3 = arith.constant 0 : index
    %4 = vector.load %arg3[%c0_2, %c0_3] : memref<128x128xbf16, #tpu.memory_space<vmem>>, vector<128x128xbf16>
    %cst = arith.constant dense<0.000000e+00> : vector<512x128xf32>
    %5 = tpu.matmul %3, %4, %cst {dimension_numbers = #tpu.dot_dimension_numbers<[1], [0], [0], [1], [0, 0, 1, 1], [], []>} : vector<512x128xbf16>, vector<128x128xbf16>, vector<512x128xf32> -> vector<512x128xf32>
    %6 = arith.truncf %5 : vector<512x128xf32> to vector<512x128xbf16>
    %c0_4 = arith.constant 0 : index
    %c0_5 = arith.constant 0 : index
    %7 = vector.load %arg4[%c0_4, %c0_5] : memref<512x128xbf16, #tpu.memory_space<vmem>>, vector<512x128xbf16>
    tpu.vector_store %arg4[%c0_4, %c0_5], %6 {strides = array<i32>} : memref<512x128xbf16, #tpu.memory_space<vmem>>, vector<512x128xbf16>,
    %c0_6 = arith.constant 0 : index
    %c0_7 = arith.constant 0 : index
    %8 = vector.load %arg5[%c0_6, %c0_7] : memref<2x128xf32, #tpu.memory_space<vmem>>, vector<2x128xf32>
    %cst_8 = arith.constant dense<0.000000e+00> : vector<128xf32>
    %9 = vector.multi_reduction <add>, %5, %cst_8 [0] : vector<512x128xf32> to vector<128xf32>
    %10 = vector.shape_cast %9 : vector<128xf32> to vector<1x128xf32>
    %11 = arith.mulf %5, %5 : vector<512x128xf32>
    %cst_9 = arith.constant dense<0.000000e+00> : vector<128xf32>
    %12 = vector.multi_reduction <add>, %11, %cst_9 [0] : vector<512x128xf32> to vector<128xf32>
    %13 = vector.shape_cast %12 : vector<128xf32> to vector<1x128xf32>
    %14 = tpu.concatenate %10, %13 in 0 : vector<1x128xf32>, vector<1x128xf32> -> vector<2x128xf32>
    %15 = arith.addf %8, %14 : vector<2x128xf32>
    %c0_10 = arith.constant 0 : index
    %c0_11 = arith.constant 0 : index
    %16 = vector.load %arg5[%c0_10, %c0_11] : memref<2x128xf32, #tpu.memory_space<vmem>>, vector<2x128xf32>
    tpu.vector_store %arg5[%c0_10, %c0_11], %15 {strides = array<i32>} : memref<2x128xf32, #tpu.memory_space<vmem>>, vector<2x128xf32>,
    return
  }
  func.func @transform_0(%arg0: i32, %arg1: i32) -> (i32, i32) {
    %c0_i32 = arith.constant 0 : i32
    %c0_i32_0 = arith.constant 0 : i32
    return %arg1, %c0_i32 : i32, i32
  }
  func.func @transform_1(%arg0: i32, %arg1: i32) -> (i32, i32) {
    %c0_i32 = arith.constant 0 : i32
    %c0_i32_0 = arith.constant 0 : i32
    return %c0_i32, %arg0 : i32, i32
  }
  func.func @transform_2(%arg0: i32, %arg1: i32) -> (i32, i32) {
    %c0_i32 = arith.constant 0 : i32
    return %arg1, %arg0 : i32, i32
  }
  func.func @transform_3(%arg0: i32, %arg1: i32) -> (i32, i32) {
    %c0_i32 = arith.constant 0 : i32
    %c0_i32_0 = arith.constant 0 : i32
    return %c0_i32, %arg0 : i32, i32
  }
}

module attributes {stable_mosaic.version = 11 : i64} {
  func.func @_bn_relu_kernel(%arg0: i32, %arg1: i32, %arg2: memref<512x128xbf16, #tpu.memory_space<vmem>>, %arg3: memref<1x128xf32, #tpu.memory_space<vmem>>, %arg4: memref<1x128xf32, #tpu.memory_space<vmem>>, %arg5: memref<512x128xf32, #tpu.memory_space<vmem>>) attributes {dimension_semantics = [#tpu.dimension_semantics<parallel>, #tpu.dimension_semantics<parallel>], iteration_bounds = array<i64: 1, 1>, scalar_prefetch = 0 : i64, scratch_operands = 0 : i64, tpu.core_type = #tpu.core_type<tc>, window_params = [{transform_indices = @transform_0, window_bounds = array<i64: 512, 128>}, {transform_indices = @transform_1, window_bounds = array<i64: 1, 128>}, {transform_indices = @transform_2, window_bounds = array<i64: 1, 128>}, {transform_indices = @transform_3, window_bounds = array<i64: 512, 128>}]} {
    %c0 = arith.constant 0 : index
    %c0_0 = arith.constant 0 : index
    %0 = vector.load %arg2[%c0, %c0_0] : memref<512x128xbf16, #tpu.memory_space<vmem>>, vector<512x128xbf16>
    %1 = arith.extf %0 : vector<512x128xbf16> to vector<512x128xf32>
    %c0_1 = arith.constant 0 : index
    %c0_2 = arith.constant 0 : index
    %2 = vector.load %arg3[%c0_1, %c0_2] : memref<1x128xf32, #tpu.memory_space<vmem>>, vector<1x128xf32>
    %3 = vector.broadcast %2 : vector<1x128xf32> to vector<512x128xf32>
    %4 = arith.mulf %1, %3 : vector<512x128xf32>
    %c0_3 = arith.constant 0 : index
    %c0_4 = arith.constant 0 : index
    %5 = vector.load %arg4[%c0_3, %c0_4] : memref<1x128xf32, #tpu.memory_space<vmem>>, vector<1x128xf32>
    %6 = vector.broadcast %5 : vector<1x128xf32> to vector<512x128xf32>
    %7 = arith.addf %4, %6 : vector<512x128xf32>
    %cst = arith.constant 0.000000e+00 : f32
    %8 = vector.broadcast %cst : f32 to vector<512x128xf32>
    %9 = arith.maximumf %7, %8 : vector<512x128xf32>
    %c0_5 = arith.constant 0 : index
    %c0_6 = arith.constant 0 : index
    %10 = vector.load %arg5[%c0_5, %c0_6] : memref<512x128xf32, #tpu.memory_space<vmem>>, vector<512x128xf32>
    tpu.vector_store %arg5[%c0_5, %c0_6], %9 {strides = array<i32>} : memref<512x128xf32, #tpu.memory_space<vmem>>, vector<512x128xf32>,
    return
  }
  func.func @transform_0(%arg0: i32, %arg1: i32) -> (i32, i32) {
    %c0_i32 = arith.constant 0 : i32
    return %arg1, %arg0 : i32, i32
  }
  func.func @transform_1(%arg0: i32, %arg1: i32) -> (i32, i32) {
    %c0_i32 = arith.constant 0 : i32
    %c0_i32_0 = arith.constant 0 : i32
    return %c0_i32, %arg0 : i32, i32
  }
  func.func @transform_2(%arg0: i32, %arg1: i32) -> (i32, i32) {
    %c0_i32 = arith.constant 0 : i32
    %c0_i32_0 = arith.constant 0 : i32
    return %c0_i32, %arg0 : i32, i32
  }
  func.func @transform_3(%arg0: i32, %arg1: i32) -> (i32, i32) {
    %c0_i32 = arith.constant 0 : i32
    return %arg1, %arg0 : i32, i32
  }
}

</mosaic_0001>

<llo_original>
// kernel: _forward.3
$region0: #{_forward.3}
  #allocation0 [shape = 'u32[]', space=smem, size = 0x4, offset = 0x4, fixed_abs, tag = 'smem constant byte address 0x4 - core index']
  #allocation1 [shape = 'u32[72,128]{1,0:T(1,128)}', space=vmem, size = 0x9000, scoped, tag = 'internal scratch']
  %s0 = inlined_call_operand.vmem [shape: bf16[512,128], index: 0, kind: input, shape index: {}]
  %s1 = inlined_call_operand.vmem [shape: f32[1,128], index: 1, kind: input, shape index: {}]
  %s2 = inlined_call_operand.vmem [shape: f32[1,128], index: 2, kind: input, shape index: {}]
  %s3 = inlined_call_operand.vmem [shape: f32[512,128], index: 3, kind: output, shape index: {}]
  %s4 = sld [smem:[#allocation0]]
  $region22: #{_forward.3} parent=0
    _
  %s6 = ssub.s32 1, %s4
  %s7 = scalar_select 0, %s6, %s4
  // Predicated region
  $region2: #{_forward.3} parent=0 // pred_check
    _
  $region3: #{_forward.3} parent=0 // pred_check_branch
    %9 = sbr.rel (0) target = $region5
  $region4: #{_forward.3} parent=0 // pred_region
    _
  $region5: #{_forward.3} parent=0 // pred_fallthru
    _
  // Predicated region
  $region6: #{_forward.3} parent=0 // pred_check
    _
  $region7: #{_forward.3} parent=0 // pred_check_branch
    %11 = sbr.rel (0) target = $region9
  $region8: #{_forward.3} parent=0 // pred_region
    _
  $region9: #{_forward.3} parent=0 // pred_fallthru
    _
  // Predicated region
  $region10: #{_forward.3} parent=0 // pred_check
    _
  $region11: #{_forward.3} parent=0 // pred_check_branch
    %13 = sbr.rel (0) target = $region13
  $region12: #{_forward.3} parent=0 // pred_region
    _
  $region13: #{_forward.3} parent=0 // pred_fallthru
    _
  %v14 = vld [vmem:[%s0] sm:$0xf]
  %v15 = vld [vmem:[%s0 + $0x4] sm:$0xf]
  %v16 = vld [vmem:[%s0 + $0x8] sm:$0xf]
  %v17 = vld [vmem:[%s0 + $0xc] sm:$0xf]
  %v18 = vld [vmem:[%s0 + $0x10] sm:$0xf]
  %v19 = vld [vmem:[%s0 + $0x14] sm:$0xf]
  %v20 = vld [vmem:[%s0 + $0x18] sm:$0xf]
  %v21 = vld [vmem:[%s0 + $0x1c] sm:$0xf]
  %v22 = vld [vmem:[%s0 + $0x20] sm:$0xf]
  %v23 = vld [vmem:[%s0 + $0x24] sm:$0xf]
  %v24 = vld [vmem:[%s0 + $0x28] sm:$0xf]
  %v25 = vld [vmem:[%s0 + $0x2c] sm:$0xf]
  %v26 = vld [vmem:[%s0 + $0x30] sm:$0xf]
  %v27 = vld [vmem:[%s0 + $0x34] sm:$0xf]
  %v28 = vld [vmem:[%s0 + $0x38] sm:$0xf]
  %v29 = vld [vmem:[%s0 + $0x3c] sm:$0xf]
  %v30 = vld [vmem:[%s0 + $0x40] sm:$0xf]
  %v31 = vld [vmem:[%s0 + $0x44] sm:$0xf]
  %v32 = vld [vmem:[%s0 + $0x48] sm:$0xf]
  %v33 = vld [vmem:[%s0 + $0x4c] sm:$0xf]
  %v34 = vld [vmem:[%s0 + $0x50] sm:$0xf]
  %v35 = vld [vmem:[%s0 + $0x54] sm:$0xf]
  %v36 = vld [vmem:[%s0 + $0x58] sm:$0xf]
  %v37 = vld [vmem:[%s0 + $0x5c] sm:$0xf]
  %v38 = vld [vmem:[%s0 + $0x60] sm:$0xf]
  %v39 = vld [vmem:[%s0 + $0x64] sm:$0xf]
  %v40 = vld [vmem:[%s0 + $0x68] sm:$0xf]
  %v41 = vld [vmem:[%s0 + $0x6c] sm:$0xf]
  %v42 = vld [vmem:[%s0 + $0x70] sm:$0xf]
  %v43 = vld [vmem:[%s0 + $0x74] sm:$0xf]
  %v44 = vld [vmem:[%s0 + $0x78] sm:$0xf]
  %v45 = vld [vmem:[%s0 + $0x7c] sm:$0xf]
  %v46 = vld [vmem:[%s0 + $0x80] sm:$0xf]
  %v47 = vld [vmem:[%s0 + $0x84] sm:$0xf]
  %v48 = vld [vmem:[%s0 + $0x88] sm:$0xf]
  %v49 = vld [vmem:[%s0 + $0x8c] sm:$0xf]
  %v50 = vld [vmem:[%s0 + $0x90] sm:$0xf]
  %v51 = vld [vmem:[%s0 + $0x94] sm:$0xf]
  %v52 = vld [vmem:[%s0 + $0x98] sm:$0xf]
  %v53 = vld [vmem:[%s0 + $0x9c] sm:$0xf]
  %v54 = vld [vmem:[%s0 + $0xa0] sm:$0xf]
  %v55 = vld [vmem:[%s0 + $0xa4] sm:$0xf]
  %v56 = vld [vmem:[%s0 + $0xa8] sm:$0xf]
  %v57 = vld [vmem:[%s0 + $0xac] sm:$0xf]
  %v58 = vld [vmem:[%s0 + $0xb0] sm:$0xf]
  %v59 = vld [vmem:[%s0 + $0xb4] sm:$0xf]
  %v60 = vld [vmem:[%s0 + $0xb8] sm:$0xf]
  %v61 = vld [vmem:[%s0 + $0xbc] sm:$0xf]
  %v62 = vld [vmem:[%s0 + $0xc0] sm:$0xf]
  %v63 = vld [vmem:[%s0 + $0xc4] sm:$0xf]
  %v64 = vld [vmem:[%s0 + $0xc8] sm:$0xf]
  %v65 = vld [vmem:[%s0 + $0xcc] sm:$0xf]
  %v66 = vld [vmem:[%s0 + $0xd0] sm:$0xf]
  %v67 = vld [vmem:[%s0 + $0xd4] sm:$0xf]
  %v68 = vld [vmem:[%s0 + $0xd8] sm:$0xf]
  %v69 = vld [vmem:[%s0 + $0xdc] sm:$0xf]
  %v70 = vld [vmem:[%s0 + $0xe0] sm:$0xf]
  %v71 = vld [vmem:[%s0 + $0xe4] sm:$0xf]
  %v72 = vld [vmem:[%s0 + $0xe8] sm:$0xf]
  %v73 = vld [vmem:[%s0 + $0xec] sm:$0xf]
  %v74 = vld [vmem:[%s0 + $0xf0] sm:$0xf]
  %v75 = vld [vmem:[%s0 + $0xf4] sm:$0xf]
  %v76 = vld [vmem:[%s0 + $0xf8] sm:$0xf]
  %v77 = vld [vmem:[%s0 + $0xfc] sm:$0xf]
  %v78 = vunpack.c.l.bf16 %v14
  %v79 = vunpack.c.l.bf16 %v15
  %v80 = vunpack.c.l.bf16 %v16
  %v81 = vunpack.c.l.bf16 %v17
  %v82 = vunpack.c.l.bf16 %v18
  %v83 = vunpack.c.l.bf16 %v19
  %v84 = vunpack.c.l.bf16 %v20
  %v85 = vunpack.c.l.bf16 %v21
  %v86 = vunpack.c.l.bf16 %v22
  %v87 = vunpack.c.l.bf16 %v23
  %v88 = vunpack.c.l.bf16 %v24
  %v89 = vunpack.c.l.bf16 %v25
  %v90 = vunpack.c.l.bf16 %v26
  %v91 = vunpack.c.l.bf16 %v27
  %v92 = vunpack.c.l.bf16 %v28
  %v93 = vunpack.c.l.bf16 %v29
  %v94 = vunpack.c.l.bf16 %v30
  %v95 = vunpack.c.l.bf16 %v31
  %v96 = vunpack.c.l.bf16 %v32
  %v97 = vunpack.c.l.bf16 %v33
  %v98 = vunpack.c.l.bf16 %v34
  %v99 = vunpack.c.l.bf16 %v35
  %v100 = vunpack.c.l.bf16 %v36
  %v101 = vunpack.c.l.bf16 %v37
  %v102 = vunpack.c.l.bf16 %v38
  %v103 = vunpack.c.l.bf16 %v39
  %v104 = vunpack.c.l.bf16 %v40
  %v105 = vunpack.c.l.bf16 %v41
  %v106 = vunpack.c.l.bf16 %v42
  %v107 = vunpack.c.l.bf16 %v43
  %v108 = vunpack.c.l.bf16 %v44
  %v109 = vunpack.c.l.bf16 %v45
  %v110 = vunpack.c.l.bf16 %v46
  %v111 = vunpack.c.l.bf16 %v47
  %v112 = vunpack.c.l.bf16 %v48
  %v113 = vunpack.c.l.bf16 %v49
  %v114 = vunpack.c.l.bf16 %v50
  %v115 = vunpack.c.l.bf16 %v51
  %v116 = vunpack.c.l.bf16 %v52
  %v117 = vunpack.c.l.bf16 %v53
  %v118 = vunpack.c.l.bf16 %v54
  %v119 = vunpack.c.l.bf16 %v55
  %v120 = vunpack.c.l.bf16 %v56
  %v121 = vunpack.c.l.bf16 %v57
  %v122 = vunpack.c.l.bf16 %v58
  %v123 = vunpack.c.l.bf16 %v59
  %v124 = vunpack.c.l.bf16 %v60
  %v125 = vunpack.c.l.bf16 %v61
  %v126 = vunpack.c.l.bf16 %v62
  %v127 = vunpack.c.l.bf16 %v63
  %v128 = vunpack.c.l.bf16 %v64
  %v129 = vunpack.c.l.bf16 %v65
  %v130 = vunpack.c.l.bf16 %v66
  %v131 = vunpack.c.l.bf16 %v67
  %v132 = vunpack.c.l.bf16 %v68
  %v133 = vunpack.c.l.bf16 %v69
  %v134 = vunpack.c.l.bf16 %v70
  %v135 = vunpack.c.l.bf16 %v71
  %v136 = vunpack.c.l.bf16 %v72
  %v137 = vunpack.c.l.bf16 %v73
  %v138 = vunpack.c.l.bf16 %v74
  %v139 = vunpack.c.l.bf16 %v75
  %v140 = vunpack.c.l.bf16 %v76
  %v141 = vunpack.c.l.bf16 %v77
  %v142 = vld [vmem:[%s1] sm:$0x1]
  %v144 = vperm.slane %v142, 0
  %v146 = vmul.f32 %v78, %v144
  %v147 = vmul.f32 %v79, %v144
  %v148 = vmul.f32 %v80, %v144
  %v149 = vmul.f32 %v81, %v144
  %v150 = vmul.f32 %v82, %v144
  %v151 = vmul.f32 %v83, %v144
  %v152 = vmul.f32 %v84, %v144
  %v153 = vmul.f32 %v85, %v144
  %v154 = vmul.f32 %v86, %v144
  %v155 = vmul.f32 %v87, %v144
  %v156 = vmul.f32 %v88, %v144
  %v157 = vmul.f32 %v89, %v144
  %v158 = vmul.f32 %v90, %v144
  %v159 = vmul.f32 %v91, %v144
  %v160 = vmul.f32 %v92, %v144
  %v161 = vmul.f32 %v93, %v144
  %v162 = vmul.f32 %v94, %v144
  %v163 = vmul.f32 %v95, %v144
  %v164 = vmul.f32 %v96, %v144
  %v165 = vmul.f32 %v97, %v144
  %v166 = vmul.f32 %v98, %v144
  %v167 = vmul.f32 %v99, %v144
  %v168 = vmul.f32 %v100, %v144
  %v169 = vmul.f32 %v101, %v144
  %v170 = vmul.f32 %v102, %v144
  %v171 = vmul.f32 %v103, %v144
  %v172 = vmul.f32 %v104, %v144
  %v173 = vmul.f32 %v105, %v144
  %v174 = vmul.f32 %v106, %v144
  %v175 = vmul.f32 %v107, %v144
  %v176 = vmul.f32 %v108, %v144
  %v177 = vmul.f32 %v109, %v144
  %v178 = vmul.f32 %v110, %v144
  %v179 = vmul.f32 %v111, %v144
  %v180 = vmul.f32 %v112, %v144
  %v181 = vmul.f32 %v113, %v144
  %v182 = vmul.f32 %v114, %v144
  %v183 = vmul.f32 %v115, %v144
  %v184 = vmul.f32 %v116, %v144
  %v185 = vmul.f32 %v117, %v144
  %v186 = vmul.f32 %v118, %v144
  %v187 = vmul.f32 %v119, %v144
  %v188 = vmul.f32 %v120, %v144
  %v189 = vmul.f32 %v121, %v144
  %v190 = vmul.f32 %v122, %v144
  %v191 = vmul.f32 %v123, %v144
  %v192 = vmul.f32 %v124, %v144
  %v193 = vmul.f32 %v125, %v144
  %v194 = vmul.f32 %v126, %v144
  %v195 = vmul.f32 %v127, %v144
  %v196 = vmul.f32 %v128, %v144
  %v197 = vmul.f32 %v129, %v144
  %v198 = vmul.f32 %v130, %v144
  %v199 = vmul.f32 %v131, %v144
  %v200 = vmul.f32 %v132, %v144
  %v201 = vmul.f32 %v133, %v144
  %v202 = vmul.f32 %v134, %v144
  %v203 = vmul.f32 %v135, %v144
  %v204 = vmul.f32 %v136, %v144
  %v205 = vmul.f32 %v137, %v144
  %v206 = vmul.f32 %v138, %v144
  %v207 = vmul.f32 %v139, %v144
  %v208 = vmul.f32 %v140, %v144
  %v209 = vmul.f32 %v141, %v144
  %v210 = vld [vmem:[%s2] sm:$0x1]
  %v212 = vperm.slane %v210, 0
  %v214 = vadd.f32 %v146, %v212
  %v215 = vadd.f32 %v147, %v212
  %v216 = vadd.f32 %v148, %v212
  %v217 = vadd.f32 %v149, %v212
  %v218 = vadd.f32 %v150, %v212
  %v219 = vadd.f32 %v151, %v212
  %v220 = vadd.f32 %v152, %v212
  %v221 = vadd.f32 %v153, %v212
  %v222 = vadd.f32 %v154, %v212
  %v223 = vadd.f32 %v155, %v212
  %v224 = vadd.f32 %v156, %v212
  %v225 = vadd.f32 %v157, %v212
  %v226 = vadd.f32 %v158, %v212
  %v227 = vadd.f32 %v159, %v212
  %v228 = vadd.f32 %v160, %v212
  %v229 = vadd.f32 %v161, %v212
  %v230 = vadd.f32 %v162, %v212
  %v231 = vadd.f32 %v163, %v212
  %v232 = vadd.f32 %v164, %v212
  %v233 = vadd.f32 %v165, %v212
  %v234 = vadd.f32 %v166, %v212
  %v235 = vadd.f32 %v167, %v212
  %v236 = vadd.f32 %v168, %v212
  %v237 = vadd.f32 %v169, %v212
  %v238 = vadd.f32 %v170, %v212
  %v239 = vadd.f32 %v171, %v212
  %v240 = vadd.f32 %v172, %v212
  %v241 = vadd.f32 %v173, %v212
  %v242 = vadd.f32 %v174, %v212
  %v243 = vadd.f32 %v175, %v212
  %v244 = vadd.f32 %v176, %v212
  %v245 = vadd.f32 %v177, %v212
  %v246 = vadd.f32 %v178, %v212
  %v247 = vadd.f32 %v179, %v212
  %v248 = vadd.f32 %v180, %v212
  %v249 = vadd.f32 %v181, %v212
  %v250 = vadd.f32 %v182, %v212
  %v251 = vadd.f32 %v183, %v212
  %v252 = vadd.f32 %v184, %v212
  %v253 = vadd.f32 %v185, %v212
  %v254 = vadd.f32 %v186, %v212
  %v255 = vadd.f32 %v187, %v212
  %v256 = vadd.f32 %v188, %v212
  %v257 = vadd.f32 %v189, %v212
  %v258 = vadd.f32 %v190, %v212
  %v259 = vadd.f32 %v191, %v212
  %v260 = vadd.f32 %v192, %v212
  %v261 = vadd.f32 %v193, %v212
  %v262 = vadd.f32 %v194, %v212
  %v263 = vadd.f32 %v195, %v212
  %v264 = vadd.f32 %v196, %v212
  %v265 = vadd.f32 %v197, %v212
  %v266 = vadd.f32 %v198, %v212
  %v267 = vadd.f32 %v199, %v212
  %v268 = vadd.f32 %v200, %v212
  %v269 = vadd.f32 %v201, %v212
  %v270 = vadd.f32 %v202, %v212
  %v271 = vadd.f32 %v203, %v212
  %v272 = vadd.f32 %v204, %v212
  %v273 = vadd.f32 %v205, %v212
  %v274 = vadd.f32 %v206, %v212
  %v275 = vadd.f32 %v207, %v212
  %v276 = vadd.f32 %v208, %v212
  %v277 = vadd.f32 %v209, %v212
  %v278 = vmax.f32 %v214, 0.0
  %v279 = vmax.f32 %v215, 0.0
  %v280 = vmax.f32 %v216, 0.0
  %v281 = vmax.f32 %v217, 0.0
  %v282 = vmax.f32 %v218, 0.0
  %v283 = vmax.f32 %v219, 0.0
  %v284 = vmax.f32 %v220, 0.0
  %v285 = vmax.f32 %v221, 0.0
  %v286 = vmax.f32 %v222, 0.0
  %v287 = vmax.f32 %v223, 0.0
  %v288 = vmax.f32 %v224, 0.0
  %v289 = vmax.f32 %v225, 0.0
  %v290 = vmax.f32 %v226, 0.0
  %v291 = vmax.f32 %v227, 0.0
  %v292 = vmax.f32 %v228, 0.0
  %v293 = vmax.f32 %v229, 0.0
  %v294 = vmax.f32 %v230, 0.0
  %v295 = vmax.f32 %v231, 0.0
  %v296 = vmax.f32 %v232, 0.0
  %v297 = vmax.f32 %v233, 0.0
  %v298 = vmax.f32 %v234, 0.0
  %v299 = vmax.f32 %v235, 0.0
  %v300 = vmax.f32 %v236, 0.0
  %v301 = vmax.f32 %v237, 0.0
  %v302 = vmax.f32 %v238, 0.0
  %v303 = vmax.f32 %v239, 0.0
  %v304 = vmax.f32 %v240, 0.0
  %v305 = vmax.f32 %v241, 0.0
  %v306 = vmax.f32 %v242, 0.0
  %v307 = vmax.f32 %v243, 0.0
  %v308 = vmax.f32 %v244, 0.0
  %v309 = vmax.f32 %v245, 0.0
  %v310 = vmax.f32 %v246, 0.0
  %v311 = vmax.f32 %v247, 0.0
  %v312 = vmax.f32 %v248, 0.0
  %v313 = vmax.f32 %v249, 0.0
  %v314 = vmax.f32 %v250, 0.0
  %v315 = vmax.f32 %v251, 0.0
  %v316 = vmax.f32 %v252, 0.0
  %v317 = vmax.f32 %v253, 0.0
  %v318 = vmax.f32 %v254, 0.0
  %v319 = vmax.f32 %v255, 0.0
  %v320 = vmax.f32 %v256, 0.0
  %v321 = vmax.f32 %v257, 0.0
  %v322 = vmax.f32 %v258, 0.0
  %v323 = vmax.f32 %v259, 0.0
  %v324 = vmax.f32 %v260, 0.0
  %v325 = vmax.f32 %v261, 0.0
  %v326 = vmax.f32 %v262, 0.0
  %v327 = vmax.f32 %v263, 0.0
  %v328 = vmax.f32 %v264, 0.0
  %v329 = vmax.f32 %v265, 0.0
  %v330 = vmax.f32 %v266, 0.0
  %v331 = vmax.f32 %v267, 0.0
  %v332 = vmax.f32 %v268, 0.0
  %v333 = vmax.f32 %v269, 0.0
  %v334 = vmax.f32 %v270, 0.0
  %v335 = vmax.f32 %v271, 0.0
  %v336 = vmax.f32 %v272, 0.0
  %v337 = vmax.f32 %v273, 0.0
  %v338 = vmax.f32 %v274, 0.0
  %v339 = vmax.f32 %v275, 0.0
  %v340 = vmax.f32 %v276, 0.0
  %v341 = vmax.f32 %v277, 0.0
  %342 = vst [vmem:[%s3] sm:$0xff] %v278
  %343 = vst [vmem:[%s3 + $0x8] sm:$0xff] %v279
  %344 = vst [vmem:[%s3 + $0x10] sm:$0xff] %v280
  %345 = vst [vmem:[%s3 + $0x18] sm:$0xff] %v281
  %346 = vst [vmem:[%s3 + $0x20] sm:$0xff] %v282
  %347 = vst [vmem:[%s3 + $0x28] sm:$0xff] %v283
  %348 = vst [vmem:[%s3 + $0x30] sm:$0xff] %v284
  %349 = vst [vmem:[%s3 + $0x38] sm:$0xff] %v285
  %350 = vst [vmem:[%s3 + $0x40] sm:$0xff] %v286
  %351 = vst [vmem:[%s3 + $0x48] sm:$0xff] %v287
  %352 = vst [vmem:[%s3 + $0x50] sm:$0xff] %v288
  %353 = vst [vmem:[%s3 + $0x58] sm:$0xff] %v289
  %354 = vst [vmem:[%s3 + $0x60] sm:$0xff] %v290
  %355 = vst [vmem:[%s3 + $0x68] sm:$0xff] %v291
  %356 = vst [vmem:[%s3 + $0x70] sm:$0xff] %v292
  %357 = vst [vmem:[%s3 + $0x78] sm:$0xff] %v293
  %358 = vst [vmem:[%s3 + $0x80] sm:$0xff] %v294
  %359 = vst [vmem:[%s3 + $0x88] sm:$0xff] %v295
  %360 = vst [vmem:[%s3 + $0x90] sm:$0xff] %v296
  %361 = vst [vmem:[%s3 + $0x98] sm:$0xff] %v297
  %362 = vst [vmem:[%s3 + $0xa0] sm:$0xff] %v298
  %363 = vst [vmem:[%s3 + $0xa8] sm:$0xff] %v299
  %364 = vst [vmem:[%s3 + $0xb0] sm:$0xff] %v300
  %365 = vst [vmem:[%s3 + $0xb8] sm:$0xff] %v301
  %366 = vst [vmem:[%s3 + $0xc0] sm:$0xff] %v302
  %367 = vst [vmem:[%s3 + $0xc8] sm:$0xff] %v303
  %368 = vst [vmem:[%s3 + $0xd0] sm:$0xff] %v304
  %369 = vst [vmem:[%s3 + $0xd8] sm:$0xff] %v305
  %370 = vst [vmem:[%s3 + $0xe0] sm:$0xff] %v306
  %371 = vst [vmem:[%s3 + $0xe8] sm:$0xff] %v307
  %372 = vst [vmem:[%s3 + $0xf0] sm:$0xff] %v308
  %373 = vst [vmem:[%s3 + $0xf8] sm:$0xff] %v309
  %374 = vst [vmem:[%s3 + $0x100] sm:$0xff] %v310
  %375 = vst [vmem:[%s3 + $0x108] sm:$0xff] %v311
  %376 = vst [vmem:[%s3 + $0x110] sm:$0xff] %v312
  %377 = vst [vmem:[%s3 + $0x118] sm:$0xff] %v313
  %378 = vst [vmem:[%s3 + $0x120] sm:$0xff] %v314
  %379 = vst [vmem:[%s3 + $0x128] sm:$0xff] %v315
  %380 = vst [vmem:[%s3 + $0x130] sm:$0xff] %v316
  %381 = vst [vmem:[%s3 + $0x138] sm:$0xff] %v317
  %382 = vst [vmem:[%s3 + $0x140] sm:$0xff] %v318
  %383 = vst [vmem:[%s3 + $0x148] sm:$0xff] %v319
  %384 = vst [vmem:[%s3 + $0x150] sm:$0xff] %v320
  %385 = vst [vmem:[%s3 + $0x158] sm:$0xff] %v321
  %386 = vst [vmem:[%s3 + $0x160] sm:$0xff] %v322
  %387 = vst [vmem:[%s3 + $0x168] sm:$0xff] %v323
  %388 = vst [vmem:[%s3 + $0x170] sm:$0xff] %v324
  %389 = vst [vmem:[%s3 + $0x178] sm:$0xff] %v325
  %390 = vst [vmem:[%s3 + $0x180] sm:$0xff] %v326
  %391 = vst [vmem:[%s3 + $0x188] sm:$0xff] %v327
  %392 = vst [vmem:[%s3 + $0x190] sm:$0xff] %v328
  %393 = vst [vmem:[%s3 + $0x198] sm:$0xff] %v329
  %394 = vst [vmem:[%s3 + $0x1a0] sm:$0xff] %v330
  %395 = vst [vmem:[%s3 + $0x1a8] sm:$0xff] %v331
  %396 = vst [vmem:[%s3 + $0x1b0] sm:$0xff] %v332
  %397 = vst [vmem:[%s3 + $0x1b8] sm:$0xff] %v333
  %398 = vst [vmem:[%s3 + $0x1c0] sm:$0xff] %v334
  %399 = vst [vmem:[%s3 + $0x1c8] sm:$0xff] %v335
  %400 = vst [vmem:[%s3 + $0x1d0] sm:$0xff] %v336
  %401 = vst [vmem:[%s3 + $0x1d8] sm:$0xff] %v337
  %402 = vst [vmem:[%s3 + $0x1e0] sm:$0xff] %v338
  %403 = vst [vmem:[%s3 + $0x1e8] sm:$0xff] %v339
  %404 = vst [vmem:[%s3 + $0x1f0] sm:$0xff] %v340
  %405 = vst [vmem:[%s3 + $0x1f8] sm:$0xff] %v341
  // Predicated region
  $region14: #{_forward.3} parent=0 // pred_check
    _
  $region15: #{_forward.3} parent=0 // pred_check_branch
    %407 = sbr.rel (0) target = $region17
  $region16: #{_forward.3} parent=0 // pred_region
    _
  $region17: #{_forward.3} parent=0 // pred_fallthru
    _
  // Predicated region
  $region18: #{_forward.3} parent=0 // pred_check
    _
  $region19: #{_forward.3} parent=0 // pred_check_branch
    %409 = sbr.rel (0) target = $region21
  $region20: #{_forward.3} parent=0 // pred_region
    _
  $region21: #{_forward.3} parent=0 // pred_fallthru
    _

// kernel: _forward.2
$region0: #{_forward.2}
  #allocation0 [shape = 'u32[]', space=smem, size = 0x4, offset = 0x4, fixed_abs, tag = 'smem constant byte address 0x4 - core index']
  #allocation1 [shape = 'u32[72,128]{1,0:T(1,128)}', space=vmem, size = 0x9000, scoped, tag = 'internal scratch']
  %s0 = inlined_call_operand.vmem [shape: bf16[512,128], index: 0, kind: input, shape index: {}]
  %s1 = inlined_call_operand.vmem [shape: bf16[128,128], index: 1, kind: input, shape index: {}]
  %s2 = inlined_call_operand.vmem [shape: bf16[512,128], index: 2, kind: output, shape index: {0}]
  %s3 = inlined_call_operand.vmem [shape: f32[2,128], index: 3, kind: output, shape index: {1}]
  %4 = xla_tuple %s2, %s3
  %s5 = sld [smem:[#allocation0]]
  $region30: #{_forward.2} parent=0
    _
  %s7 = ssub.s32 1, %s5
  %s8 = scalar_select 0, %s7, %s5
  // Predicated region
  $region2: #{_forward.2} parent=0 // pred_check
    _
  $region3: #{_forward.2} parent=0 // pred_check_branch
    %10 = sbr.rel (0) target = $region5
  $region4: #{_forward.2} parent=0 // pred_region
    _
  $region5: #{_forward.2} parent=0 // pred_fallthru
    _
  // Predicated region
  $region6: #{_forward.2} parent=0 // pred_check
    _
  $region7: #{_forward.2} parent=0 // pred_check_branch
    %12 = sbr.rel (0) target = $region9
  $region8: #{_forward.2} parent=0 // pred_region
    _
  $region9: #{_forward.2} parent=0 // pred_fallthru
    _
  %p13 = scmp.eq.s32.totalorder 0, 0
  // Predicated region
  $region10: #{_forward.2} parent=0 // pred_check
    %p14 = pneg %p13
  $region11: #{_forward.2} parent=0 // pred_check_branch
    %16 = sbr.rel (%p14) target = $region13
  $region12: #{_forward.2} parent=0 // pred_region
    %17 = vst [vmem:[%s3] sm:$0x3] 0.0
  $region13: #{_forward.2} parent=0 // pred_fallthru
    _
  %v18 = vld [vmem:[%s0] sm:$0xf]
  %v19 = vld [vmem:[%s0 + $0x4] sm:$0xf]
  %v20 = vld [vmem:[%s0 + $0x8] sm:$0xf]
  %v21 = vld [vmem:[%s0 + $0xc] sm:$0xf]
  %v22 = vld [vmem:[%s0 + $0x10] sm:$0xf]
  %v23 = vld [vmem:[%s0 + $0x14] sm:$0xf]
  %v24 = vld [vmem:[%s0 + $0x18] sm:$0xf]
  %v25 = vld [vmem:[%s0 + $0x1c] sm:$0xf]
  %v26 = vld [vmem:[%s0 + $0x20] sm:$0xf]
  %v27 = vld [vmem:[%s0 + $0x24] sm:$0xf]
  %v28 = vld [vmem:[%s0 + $0x28] sm:$0xf]
  %v29 = vld [vmem:[%s0 + $0x2c] sm:$0xf]
  %v30 = vld [vmem:[%s0 + $0x30] sm:$0xf]
  %v31 = vld [vmem:[%s0 + $0x34] sm:$0xf]
  %v32 = vld [vmem:[%s0 + $0x38] sm:$0xf]
  %v33 = vld [vmem:[%s0 + $0x3c] sm:$0xf]
  %v34 = vld [vmem:[%s0 + $0x40] sm:$0xf]
  %v35 = vld [vmem:[%s0 + $0x44] sm:$0xf]
  %v36 = vld [vmem:[%s0 + $0x48] sm:$0xf]
  %v37 = vld [vmem:[%s0 + $0x4c] sm:$0xf]
  %v38 = vld [vmem:[%s0 + $0x50] sm:$0xf]
  %v39 = vld [vmem:[%s0 + $0x54] sm:$0xf]
  %v40 = vld [vmem:[%s0 + $0x58] sm:$0xf]
  %v41 = vld [vmem:[%s0 + $0x5c] sm:$0xf]
  %v42 = vld [vmem:[%s0 + $0x60] sm:$0xf]
  %v43 = vld [vmem:[%s0 + $0x64] sm:$0xf]
  %v44 = vld [vmem:[%s0 + $0x68] sm:$0xf]
  %v45 = vld [vmem:[%s0 + $0x6c] sm:$0xf]
  %v46 = vld [vmem:[%s0 + $0x70] sm:$0xf]
  %v47 = vld [vmem:[%s0 + $0x74] sm:$0xf]
  %v48 = vld [vmem:[%s0 + $0x78] sm:$0xf]
  %v49 = vld [vmem:[%s0 + $0x7c] sm:$0xf]
  %v50 = vld [vmem:[%s0 + $0x80] sm:$0xf]
  %v51 = vld [vmem:[%s0 + $0x84] sm:$0xf]
  %v52 = vld [vmem:[%s0 + $0x88] sm:$0xf]
  %v53 = vld [vmem:[%s0 + $0x8c] sm:$0xf]
  %v54 = vld [vmem:[%s0 + $0x90] sm:$0xf]
  %v55 = vld [vmem:[%s0 + $0x94] sm:$0xf]
  %v56 = vld [vmem:[%s0 + $0x98] sm:$0xf]
  %v57 = vld [vmem:[%s0 + $0x9c] sm:$0xf]
  %v58 = vld [vmem:[%s0 + $0xa0] sm:$0xf]
  %v59 = vld [vmem:[%s0 + $0xa4] sm:$0xf]
  %v60 = vld [vmem:[%s0 + $0xa8] sm:$0xf]
  %v61 = vld [vmem:[%s0 + $0xac] sm:$0xf]
  %v62 = vld [vmem:[%s0 + $0xb0] sm:$0xf]
  %v63 = vld [vmem:[%s0 + $0xb4] sm:$0xf]
  %v64 = vld [vmem:[%s0 + $0xb8] sm:$0xf]
  %v65 = vld [vmem:[%s0 + $0xbc] sm:$0xf]
  %v66 = vld [vmem:[%s0 + $0xc0] sm:$0xf]
  %v67 = vld [vmem:[%s0 + $0xc4] sm:$0xf]
  %v68 = vld [vmem:[%s0 + $0xc8] sm:$0xf]
  %v69 = vld [vmem:[%s0 + $0xcc] sm:$0xf]
  %v70 = vld [vmem:[%s0 + $0xd0] sm:$0xf]
  %v71 = vld [vmem:[%s0 + $0xd4] sm:$0xf]
  %v72 = vld [vmem:[%s0 + $0xd8] sm:$0xf]
  %v73 = vld [vmem:[%s0 + $0xdc] sm:$0xf]
  %v74 = vld [vmem:[%s0 + $0xe0] sm:$0xf]
  %v75 = vld [vmem:[%s0 + $0xe4] sm:$0xf]
  %v76 = vld [vmem:[%s0 + $0xe8] sm:$0xf]
  %v77 = vld [vmem:[%s0 + $0xec] sm:$0xf]
  %v78 = vld [vmem:[%s0 + $0xf0] sm:$0xf]
  %v79 = vld [vmem:[%s0 + $0xf4] sm:$0xf]
  %v80 = vld [vmem:[%s0 + $0xf8] sm:$0xf]
  %v81 = vld [vmem:[%s0 + $0xfc] sm:$0xf]
  %v82 = vld [vmem:[%s1] sm:$0xf]
  %v83 = vld [vmem:[%s1 + $0x4] sm:$0xf]
  %v84 = vld [vmem:[%s1 + $0x8] sm:$0xf]
  %v85 = vld [vmem:[%s1 + $0xc] sm:$0xf]
  %v86 = vld [vmem:[%s1 + $0x10] sm:$0xf]
  %v87 = vld [vmem:[%s1 + $0x14] sm:$0xf]
  %v88 = vld [vmem:[%s1 + $0x18] sm:$0xf]
  %v89 = vld [vmem:[%s1 + $0x1c] sm:$0xf]
  %v90 = vld [vmem:[%s1 + $0x20] sm:$0xf]
  %v91 = vld [vmem:[%s1 + $0x24] sm:$0xf]
  %v92 = vld [vmem:[%s1 + $0x28] sm:$0xf]
  %v93 = vld [vmem:[%s1 + $0x2c] sm:$0xf]
  %v94 = vld [vmem:[%s1 + $0x30] sm:$0xf]
  %v95 = vld [vmem:[%s1 + $0x34] sm:$0xf]
  %v96 = vld [vmem:[%s1 + $0x38] sm:$0xf]
  %v97 = vld [vmem:[%s1 + $0x3c] sm:$0xf]
  %v162 = vunpack.c.l.b16 %v18
  %v163 = vunpack.c.l.b16 %v19
  %v164 = vunpack.c.l.b16 %v20
  %v165 = vunpack.c.l.b16 %v21
  %v166 = vunpack.c.l.b16 %v22
  %v167 = vunpack.c.l.b16 %v23
  %v168 = vunpack.c.l.b16 %v24
  %v169 = vunpack.c.l.b16 %v25
  %v170 = vunpack.c.l.b16 %v26
  %v171 = vunpack.c.l.b16 %v27
  %v172 = vunpack.c.l.b16 %v28
  %v173 = vunpack.c.l.b16 %v29
  %v174 = vunpack.c.l.b16 %v30
  %v175 = vunpack.c.l.b16 %v31
  %v176 = vunpack.c.l.b16 %v32
  %v177 = vunpack.c.l.b16 %v33
  %v178 = vunpack.c.l.b16 %v34
  %v179 = vunpack.c.l.b16 %v35
  %v180 = vunpack.c.l.b16 %v36
  %v181 = vunpack.c.l.b16 %v37
  %v182 = vunpack.c.l.b16 %v38
  %v183 = vunpack.c.l.b16 %v39
  %v184 = vunpack.c.l.b16 %v40
  %v185 = vunpack.c.l.b16 %v41
  %v186 = vunpack.c.l.b16 %v42
  %v187 = vunpack.c.l.b16 %v43
  %v188 = vunpack.c.l.b16 %v44
  %v189 = vunpack.c.l.b16 %v45
  %v190 = vunpack.c.l.b16 %v46
  %v191 = vunpack.c.l.b16 %v47
  %v192 = vunpack.c.l.b16 %v48
  %v193 = vunpack.c.l.b16 %v49
  %v194 = vunpack.c.l.b16 %v50
  %v195 = vunpack.c.l.b16 %v51
  %v196 = vunpack.c.l.b16 %v52
  %v197 = vunpack.c.l.b16 %v53
  %v198 = vunpack.c.l.b16 %v54
  %v199 = vunpack.c.l.b16 %v55
  %v200 = vunpack.c.l.b16 %v56
  %v201 = vunpack.c.l.b16 %v57
  %v202 = vunpack.c.l.b16 %v58
  %v203 = vunpack.c.l.b16 %v59
  %v204 = vunpack.c.l.b16 %v60
  %v205 = vunpack.c.l.b16 %v61
  %v206 = vunpack.c.l.b16 %v62
  %v207 = vunpack.c.l.b16 %v63
  %v208 = vunpack.c.l.b16 %v64
  %v209 = vunpack.c.l.b16 %v65
  %v210 = vunpack.c.l.b16 %v66
  %v211 = vunpack.c.l.b16 %v67
  %v212 = vunpack.c.l.b16 %v68
  %v213 = vunpack.c.l.b16 %v69
  %v214 = vunpack.c.l.b16 %v70
  %v215 = vunpack.c.l.b16 %v71
  %v216 = vunpack.c.l.b16 %v72
  %v217 = vunpack.c.l.b16 %v73
  %v218 = vunpack.c.l.b16 %v74
  %v219 = vunpack.c.l.b16 %v75
  %v220 = vunpack.c.l.b16 %v76
  %v221 = vunpack.c.l.b16 %v77
  %v222 = vunpack.c.l.b16 %v78
  %v223 = vunpack.c.l.b16 %v79
  %v224 = vunpack.c.l.b16 %v80
  %v225 = vunpack.c.l.b16 %v81
  %v226 = vpack.c.b16 %v163, %v162
  %v227 = vpack.c.b16 %v165, %v164
  %v228 = vpack.c.b16 %v167, %v166
  %v229 = vpack.c.b16 %v169, %v168
  %v230 = vpack.c.b16 %v171, %v170
  %v231 = vpack.c.b16 %v173, %v172
  %v232 = vpack.c.b16 %v175, %v174
  %v233 = vpack.c.b16 %v177, %v176
  %v234 = vpack.c.b16 %v179, %v178
  %v235 = vpack.c.b16 %v181, %v180
  %v236 = vpack.c.b16 %v183, %v182
  %v237 = vpack.c.b16 %v185, %v184
  %v238 = vpack.c.b16 %v187, %v186
  %v239 = vpack.c.b16 %v189, %v188
  %v240 = vpack.c.b16 %v191, %v190
  %v241 = vpack.c.b16 %v193, %v192
  %v242 = vpack.c.b16 %v195, %v194
  %v243 = vpack.c.b16 %v197, %v196
  %v244 = vpack.c.b16 %v199, %v198
  %v245 = vpack.c.b16 %v201, %v200
  %v246 = vpack.c.b16 %v203, %v202
  %v247 = vpack.c.b16 %v205, %v204
  %v248 = vpack.c.b16 %v207, %v206
  %v249 = vpack.c.b16 %v209, %v208
  %v250 = vpack.c.b16 %v211, %v210
  %v251 = vpack.c.b16 %v213, %v212
  %v252 = vpack.c.b16 %v215, %v214
  %v253 = vpack.c.b16 %v217, %v216
  %v254 = vpack.c.b16 %v219, %v218
  %v255 = vpack.c.b16 %v221, %v220
  %v256 = vpack.c.b16 %v223, %v222
  %v257 = vpack.c.b16 %v225, %v224
  %v306 = vunpack.c.l.b16 %v82
  %v307 = vunpack.c.l.b16 %v83
  %v308 = vunpack.c.l.b16 %v84
  %v309 = vunpack.c.l.b16 %v85
  %v310 = vunpack.c.l.b16 %v86
  %v311 = vunpack.c.l.b16 %v87
  %v312 = vunpack.c.l.b16 %v88
  %v313 = vunpack.c.l.b16 %v89
  %v314 = vunpack.c.l.b16 %v90
  %v315 = vunpack.c.l.b16 %v91
  %v316 = vunpack.c.l.b16 %v92
  %v317 = vunpack.c.l.b16 %v93
  %v318 = vunpack.c.l.b16 %v94
  %v319 = vunpack.c.l.b16 %v95
  %v320 = vunpack.c.l.b16 %v96
  %v321 = vunpack.c.l.b16 %v97
  %v322 = vpack.c.b16 %v307, %v306
  %v323 = vpack.c.b16 %v309, %v308
  %v324 = vpack.c.b16 %v311, %v310
  %v325 = vpack.c.b16 %v313, %v312
  %v326 = vpack.c.b16 %v315, %v314
  %v327 = vpack.c.b16 %v317, %v316
  %v328 = vpack.c.b16 %v319, %v318
  %v329 = vpack.c.b16 %v321, %v320
  %338 = vmatpush.bf16.msra.mxu0 %v329
  %339 = vmatpush.bf16.msra.mxu0 %v328
  %340 = vmatpush.bf16.msra.mxu0 %v327
  %341 = vmatpush.bf16.msra.mxu0 %v326
  %342 = vmatpush.bf16.msra.mxu0 %v325
  %343 = vmatpush.bf16.msra.mxu0 %v324
  %344 = vmatpush.bf16.msra.mxu0 %v323
  %345 = vmatpush.bf16.msra.mxu0 %v322
  %346 = vmatmul.bf16.gmra.mxu0 %v226
  %v347 = vpop.f32.mrf.mxu0
  %v348 = vadd.f32 0.0, %v347
  %v349 = vpop.f32.mrf.mxu0
  %v350 = vadd.f32 0.0, %v349
  %351 = vmatmul.bf16.gmra.mxu0 %v227
  %v352 = vpop.f32.mrf.mxu0
  %v353 = vadd.f32 0.0, %v352
  %v354 = vpop.f32.mrf.mxu0
  %v355 = vadd.f32 0.0, %v354
  %356 = vmatmul.bf16.gmra.mxu0 %v228
  %v357 = vpop.f32.mrf.mxu0
  %v358 = vadd.f32 0.0, %v357
  %v359 = vpop.f32.mrf.mxu0
  %v360 = vadd.f32 0.0, %v359
  %361 = vmatmul.bf16.gmra.mxu0 %v229
  %v362 = vpop.f32.mrf.mxu0
  %v363 = vadd.f32 0.0, %v362
  %v364 = vpop.f32.mrf.mxu0
  %v365 = vadd.f32 0.0, %v364
  %366 = vmatmul.bf16.gmra.mxu0 %v230
  %v367 = vpop.f32.mrf.mxu0
  %v368 = vadd.f32 0.0, %v367
  %v369 = vpop.f32.mrf.mxu0
  %v370 = vadd.f32 0.0, %v369
  %371 = vmatmul.bf16.gmra.mxu0 %v231
  %v372 = vpop.f32.mrf.mxu0
  %v373 = vadd.f32 0.0, %v372
  %v374 = vpop.f32.mrf.mxu0
  %v375 = vadd.f32 0.0, %v374
  %376 = vmatmul.bf16.gmra.mxu0 %v232
  %v377 = vpop.f32.mrf.mxu0
  %v378 = vadd.f32 0.0, %v377
  %v379 = vpop.f32.mrf.mxu0
  %v380 = vadd.f32 0.0, %v379
  %381 = vmatmul.bf16.gmra.mxu0 %v233
  %v382 = vpop.f32.mrf.mxu0
  %v383 = vadd.f32 0.0, %v382
  %v384 = vpop.f32.mrf.mxu0
  %v385 = vadd.f32 0.0, %v384
  %386 = vmatmul.bf16.gmra.mxu0 %v234
  %v387 = vpop.f32.mrf.mxu0
  %v388 = vadd.f32 0.0, %v387
  %v389 = vpop.f32.mrf.mxu0
  %v390 = vadd.f32 0.0, %v389
  %391 = vmatmul.bf16.gmra.mxu0 %v235
  %v392 = vpop.f32.mrf.mxu0
  %v393 = vadd.f32 0.0, %v392
  %v394 = vpop.f32.mrf.mxu0
  %v395 = vadd.f32 0.0, %v394
  %396 = vmatmul.bf16.gmra.mxu0 %v236
  %v397 = vpop.f32.mrf.mxu0
  %v398 = vadd.f32 0.0, %v397
  %v399 = vpop.f32.mrf.mxu0
  %v400 = vadd.f32 0.0, %v399
  %401 = vmatmul.bf16.gmra.mxu0 %v237
  %v402 = vpop.f32.mrf.mxu0
  %v403 = vadd.f32 0.0, %v402
  %v404 = vpop.f32.mrf.mxu0
  %v405 = vadd.f32 0.0, %v404
  %406 = vmatmul.bf16.gmra.mxu0 %v238
  %v407 = vpop.f32.mrf.mxu0
  %v408 = vadd.f32 0.0, %v407
  %v409 = vpop.f32.mrf.mxu0
  %v410 = vadd.f32 0.0, %v409
  %411 = vmatmul.bf16.gmra.mxu0 %v239
  %v412 = vpop.f32.mrf.mxu0
  %v413 = vadd.f32 0.0, %v412
  %v414 = vpop.f32.mrf.mxu0
  %v415 = vadd.f32 0.0, %v414
  %416 = vmatmul.bf16.gmra.mxu0 %v240
  %v417 = vpop.f32.mrf.mxu0
  %v418 = vadd.f32 0.0, %v417
  %v419 = vpop.f32.mrf.mxu0
  %v420 = vadd.f32 0.0, %v419
  %421 = vmatmul.bf16.gmra.mxu0 %v241
  %v422 = vpop.f32.mrf.mxu0
  %v423 = vadd.f32 0.0, %v422
  %v424 = vpop.f32.mrf.mxu0
  %v425 = vadd.f32 0.0, %v424
  %426 = vmatmul.bf16.gmra.mxu0 %v242
  %v427 = vpop.f32.mrf.mxu0
  %v428 = vadd.f32 0.0, %v427
  %v429 = vpop.f32.mrf.mxu0
  %v430 = vadd.f32 0.0, %v429
  %431 = vmatmul.bf16.gmra.mxu0 %v243
  %v432 = vpop.f32.mrf.mxu0
  %v433 = vadd.f32 0.0, %v432
  %v434 = vpop.f32.mrf.mxu0
  %v435 = vadd.f32 0.0, %v434
  %436 = vmatmul.bf16.gmra.mxu0 %v244
  %v437 = vpop.f32.mrf.mxu0
  %v438 = vadd.f32 0.0, %v437
  %v439 = vpop.f32.mrf.mxu0
  %v440 = vadd.f32 0.0, %v439
  %441 = vmatmul.bf16.gmra.mxu0 %v245
  %v442 = vpop.f32.mrf.mxu0
  %v443 = vadd.f32 0.0, %v442
  %v444 = vpop.f32.mrf.mxu0
  %v445 = vadd.f32 0.0, %v444
  %446 = vmatmul.bf16.gmra.mxu0 %v246
  %v447 = vpop.f32.mrf.mxu0
  %v448 = vadd.f32 0.0, %v447
  %v449 = vpop.f32.mrf.mxu0
  %v450 = vadd.f32 0.0, %v449
  %451 = vmatmul.bf16.gmra.mxu0 %v247
  %v452 = vpop.f32.mrf.mxu0
  %v453 = vadd.f32 0.0, %v452
  %v454 = vpop.f32.mrf.mxu0
  %v455 = vadd.f32 0.0, %v454
  %456 = vmatmul.bf16.gmra.mxu0 %v248
  %v457 = vpop.f32.mrf.mxu0
  %v458 = vadd.f32 0.0, %v457
  %v459 = vpop.f32.mrf.mxu0
  %v460 = vadd.f32 0.0, %v459
  %461 = vmatmul.bf16.gmra.mxu0 %v249
  %v462 = vpop.f32.mrf.mxu0
  %v463 = vadd.f32 0.0, %v462
  %v464 = vpop.f32.mrf.mxu0
  %v465 = vadd.f32 0.0, %v464
  %466 = vmatmul.bf16.gmra.mxu0 %v250
  %v467 = vpop.f32.mrf.mxu0
  %v468 = vadd.f32 0.0, %v467
  %v469 = vpop.f32.mrf.mxu0
  %v470 = vadd.f32 0.0, %v469
  %471 = vmatmul.bf16.gmra.mxu0 %v251
  %v472 = vpop.f32.mrf.mxu0
  %v473 = vadd.f32 0.0, %v472
  %v474 = vpop.f32.mrf.mxu0
  %v475 = vadd.f32 0.0, %v474
  %476 = vmatmul.bf16.gmra.mxu0 %v252
  %v477 = vpop.f32.mrf.mxu0
  %v478 = vadd.f32 0.0, %v477
  %v479 = vpop.f32.mrf.mxu0
  %v480 = vadd.f32 0.0, %v479
  %481 = vmatmul.bf16.gmra.mxu0 %v253
  %v482 = vpop.f32.mrf.mxu0
  %v483 = vadd.f32 0.0, %v482
  %v484 = vpop.f32.mrf.mxu0
  %v485 = vadd.f32 0.0, %v484
  %486 = vmatmul.bf16.gmra.mxu0 %v254
  %v487 = vpop.f32.mrf.mxu0
  %v488 = vadd.f32 0.0, %v487
  %v489 = vpop.f32.mrf.mxu0
  %v490 = vadd.f32 0.0, %v489
  %491 = vmatmul.bf16.gmra.mxu0 %v255
  %v492 = vpop.f32.mrf.mxu0
  %v493 = vadd.f32 0.0, %v492
  %v494 = vpop.f32.mrf.mxu0
  %v495 = vadd.f32 0.0, %v494
  %496 = vmatmul.bf16.gmra.mxu0 %v256
  %v497 = vpop.f32.mrf.mxu0
  %v498 = vadd.f32 0.0, %v497
  %v499 = vpop.f32.mrf.mxu0
  %v500 = vadd.f32 0.0, %v499
  %501 = vmatmul.bf16.gmra.mxu0 %v257
  %v502 = vpop.f32.mrf.mxu0
  %v503 = vadd.f32 0.0, %v502
  %v504 = vpop.f32.mrf.mxu0
  %v505 = vadd.f32 0.0, %v504
  %506 = vdwg.mxu0
  %v507 = vpack.c.bf16 %v348, %v348
  %v508 = vpack.c.bf16 %v350, %v350
  %v509 = vpack.c.bf16 %v353, %v353
  %v510 = vpack.c.bf16 %v355, %v355
  %v511 = vpack.c.bf16 %v358, %v358
  %v512 = vpack.c.bf16 %v360, %v360
  %v513 = vpack.c.bf16 %v363, %v363
  %v514 = vpack.c.bf16 %v365, %v365
  %v515 = vpack.c.bf16 %v368, %v368
  %v516 = vpack.c.bf16 %v370, %v370
  %v517 = vpack.c.bf16 %v373, %v373
  %v518 = vpack.c.bf16 %v375, %v375
  %v519 = vpack.c.bf16 %v378, %v378
  %v520 = vpack.c.bf16 %v380, %v380
  %v521 = vpack.c.bf16 %v383, %v383
  %v522 = vpack.c.bf16 %v385, %v385
  %v523 = vpack.c.bf16 %v388, %v388
  %v524 = vpack.c.bf16 %v390, %v390
  %v525 = vpack.c.bf16 %v393, %v393
  %v526 = vpack.c.bf16 %v395, %v395
  %v527 = vpack.c.bf16 %v398, %v398
  %v528 = vpack.c.bf16 %v400, %v400
  %v529 = vpack.c.bf16 %v403, %v403
  %v530 = vpack.c.bf16 %v405, %v405
  %v531 = vpack.c.bf16 %v408, %v408
  %v532 = vpack.c.bf16 %v410, %v410
  %v533 = vpack.c.bf16 %v413, %v413
  %v534 = vpack.c.bf16 %v415, %v415
  %v535 = vpack.c.bf16 %v418, %v418
  %v536 = vpack.c.bf16 %v420, %v420
  %v537 = vpack.c.bf16 %v423, %v423
  %v538 = vpack.c.bf16 %v425, %v425
  %v539 = vpack.c.bf16 %v428, %v428
  %v540 = vpack.c.bf16 %v430, %v430
  %v541 = vpack.c.bf16 %v433, %v433
  %v542 = vpack.c.bf16 %v435, %v435
  %v543 = vpack.c.bf16 %v438, %v438
  %v544 = vpack.c.bf16 %v440, %v440
  %v545 = vpack.c.bf16 %v443, %v443
  %v546 = vpack.c.bf16 %v445, %v445
  %v547 = vpack.c.bf16 %v448, %v448
  %v548 = vpack.c.bf16 %v450, %v450
  %v549 = vpack.c.bf16 %v453, %v453
  %v550 = vpack.c.bf16 %v455, %v455
  %v551 = vpack.c.bf16 %v458, %v458
  %v552 = vpack.c.bf16 %v460, %v460
  %v553 = vpack.c.bf16 %v463, %v463
  %v554 = vpack.c.bf16 %v465, %v465
  %v555 = vpack.c.bf16 %v468, %v468
  %v556 = vpack.c.bf16 %v470, %v470
  %v557 = vpack.c.bf16 %v473, %v473
  %v558 = vpack.c.bf16 %v475, %v475
  %v559 = vpack.c.bf16 %v478, %v478
  %v560 = vpack.c.bf16 %v480, %v480
  %v561 = vpack.c.bf16 %v483, %v483
  %v562 = vpack.c.bf16 %v485, %v485
  %v563 = vpack.c.bf16 %v488, %v488
  %v564 = vpack.c.bf16 %v490, %v490
  %v565 = vpack.c.bf16 %v493, %v493
  %v566 = vpack.c.bf16 %v495, %v495
  %v567 = vpack.c.bf16 %v498, %v498
  %v568 = vpack.c.bf16 %v500, %v500
  %v569 = vpack.c.bf16 %v503, %v503
  %v570 = vpack.c.bf16 %v505, %v505
  %571 = vst [vmem:[%s2] sm:$0xf] %v507
  %572 = vst [vmem:[%s2 + $0x4] sm:$0xf] %v508
  %573 = vst [vmem:[%s2 + $0x8] sm:$0xf] %v509
  %574 = vst [vmem:[%s2 + $0xc] sm:$0xf] %v510
  %575 = vst [vmem:[%s2 + $0x10] sm:$0xf] %v511
  %576 = vst [vmem:[%s2 + $0x14] sm:$0xf] %v512
  %577 = vst [vmem:[%s2 + $0x18] sm:$0xf] %v513
  %578 = vst [vmem:[%s2 + $0x1c] sm:$0xf] %v514
  %579 = vst [vmem:[%s2 + $0x20] sm:$0xf] %v515
  %580 = vst [vmem:[%s2 + $0x24] sm:$0xf] %v516
  %581 = vst [vmem:[%s2 + $0x28] sm:$0xf] %v517
  %582 = vst [vmem:[%s2 + $0x2c] sm:$0xf] %v518
  %583 = vst [vmem:[%s2 + $0x30] sm:$0xf] %v519
  %584 = vst [vmem:[%s2 + $0x34] sm:$0xf] %v520
  %585 = vst [vmem:[%s2 + $0x38] sm:$0xf] %v521
  %586 = vst [vmem:[%s2 + $0x3c] sm:$0xf] %v522
  %587 = vst [vmem:[%s2 + $0x40] sm:$0xf] %v523
  %588 = vst [vmem:[%s2 + $0x44] sm:$0xf] %v524
  %589 = vst [vmem:[%s2 + $0x48] sm:$0xf] %v525
  %590 = vst [vmem:[%s2 + $0x4c] sm:$0xf] %v526
  %591 = vst [vmem:[%s2 + $0x50] sm:$0xf] %v527
  %592 = vst [vmem:[%s2 + $0x54] sm:$0xf] %v528
  %593 = vst [vmem:[%s2 + $0x58] sm:$0xf] %v529
  %594 = vst [vmem:[%s2 + $0x5c] sm:$0xf] %v530
  %595 = vst [vmem:[%s2 + $0x60] sm:$0xf] %v531
  %596 = vst [vmem:[%s2 + $0x64] sm:$0xf] %v532
  %597 = vst [vmem:[%s2 + $0x68] sm:$0xf] %v533
  %598 = vst [vmem:[%s2 + $0x6c] sm:$0xf] %v534
  %599 = vst [vmem:[%s2 + $0x70] sm:$0xf] %v535
  %600 = vst [vmem:[%s2 + $0x74] sm:$0xf] %v536
  %601 = vst [vmem:[%s2 + $0x78] sm:$0xf] %v537
  %602 = vst [vmem:[%s2 + $0x7c] sm:$0xf] %v538
  %603 = vst [vmem:[%s2 + $0x80] sm:$0xf] %v539
  %604 = vst [vmem:[%s2 + $0x84] sm:$0xf] %v540
  %605 = vst [vmem:[%s2 + $0x88] sm:$0xf] %v541
  %606 = vst [vmem:[%s2 + $0x8c] sm:$0xf] %v542
  %607 = vst [vmem:[%s2 + $0x90] sm:$0xf] %v543
  %608 = vst [vmem:[%s2 + $0x94] sm:$0xf] %v544
  %609 = vst [vmem:[%s2 + $0x98] sm:$0xf] %v545
  %610 = vst [vmem:[%s2 + $0x9c] sm:$0xf] %v546
  %611 = vst [vmem:[%s2 + $0xa0] sm:$0xf] %v547
  %612 = vst [vmem:[%s2 + $0xa4] sm:$0xf] %v548
  %613 = vst [vmem:[%s2 + $0xa8] sm:$0xf] %v549
  %614 = vst [vmem:[%s2 + $0xac] sm:$0xf] %v550
  %615 = vst [vmem:[%s2 + $0xb0] sm:$0xf] %v551
  %616 = vst [vmem:[%s2 + $0xb4] sm:$0xf] %v552
  %617 = vst [vmem:[%s2 + $0xb8] sm:$0xf] %v553
  %618 = vst [vmem:[%s2 + $0xbc] sm:$0xf] %v554
  %619 = vst [vmem:[%s2 + $0xc0] sm:$0xf] %v555
  %620 = vst [vmem:[%s2 + $0xc4] sm:$0xf] %v556
  %621 = vst [vmem:[%s2 + $0xc8] sm:$0xf] %v557
  %622 = vst [vmem:[%s2 + $0xcc] sm:$0xf] %v558
  %623 = vst [vmem:[%s2 + $0xd0] sm:$0xf] %v559
  %624 = vst [vmem:[%s2 + $0xd4] sm:$0xf] %v560
  %625 = vst [vmem:[%s2 + $0xd8] sm:$0xf] %v561
  %626 = vst [vmem:[%s2 + $0xdc] sm:$0xf] %v562
  %627 = vst [vmem:[%s2 + $0xe0] sm:$0xf] %v563
  %628 = vst [vmem:[%s2 + $0xe4] sm:$0xf] %v564
  %629 = vst [vmem:[%s2 + $0xe8] sm:$0xf] %v565
  %630 = vst [vmem:[%s2 + $0xec] sm:$0xf] %v566
  %631 = vst [vmem:[%s2 + $0xf0] sm:$0xf] %v567
  %632 = vst [vmem:[%s2 + $0xf4] sm:$0xf] %v568
  %633 = vst [vmem:[%s2 + $0xf8] sm:$0xf] %v569
  %634 = vst [vmem:[%s2 + $0xfc] sm:$0xf] %v570
  %v635 = vld [vmem:[%s3] sm:$0x3]
  %v636 = vadd.f32 %v348, %v350
  %v637 = vadd.f32 %v636, %v353
  %v638 = vadd.f32 %v637, %v355
  %v639 = vadd.f32 %v638, %v358
  %v640 = vadd.f32 %v639, %v360
  %v641 = vadd.f32 %v640, %v363
  %v642 = vadd.f32 %v641, %v365
  %v643 = vadd.f32 %v642, %v368
  %v644 = vadd.f32 %v643, %v370
  %v645 = vadd.f32 %v644, %v373
  %v646 = vadd.f32 %v645, %v375
  %v647 = vadd.f32 %v646, %v378
  %v648 = vadd.f32 %v647, %v380
  %v649 = vadd.f32 %v648, %v383
  %v650 = vadd.f32 %v649, %v385
  %v651 = vadd.f32 %v650, %v388
  %v652 = vadd.f32 %v651, %v390
  %v653 = vadd.f32 %v652, %v393
  %v654 = vadd.f32 %v653, %v395
  %v655 = vadd.f32 %v654, %v398
  %v656 = vadd.f32 %v655, %v400
  %v657 = vadd.f32 %v656, %v403
  %v658 = vadd.f32 %v657, %v405
  %v659 = vadd.f32 %v658, %v408
  %v660 = vadd.f32 %v659, %v410
  %v661 = vadd.f32 %v660, %v413
  %v662 = vadd.f32 %v661, %v415
  %v663 = vadd.f32 %v662, %v418
  %v664 = vadd.f32 %v663, %v420
  %v665 = vadd.f32 %v664, %v423
  %v666 = vadd.f32 %v665, %v425
  %v667 = vadd.f32 %v666, %v428
  %v668 = vadd.f32 %v667, %v430
  %v669 = vadd.f32 %v668, %v433
  %v670 = vadd.f32 %v669, %v435
  %v671 = vadd.f32 %v670, %v438
  %v672 = vadd.f32 %v671, %v440
  %v673 = vadd.f32 %v672, %v443
  %v674 = vadd.f32 %v673, %v445
  %v675 = vadd.f32 %v674, %v448
  %v676 = vadd.f32 %v675, %v450
  %v677 = vadd.f32 %v676, %v453
  %v678 = vadd.f32 %v677, %v455
  %v679 = vadd.f32 %v678, %v458
  %v680 = vadd.f32 %v679, %v460
  %v681 = vadd.f32 %v680, %v463
  %v682 = vadd.f32 %v681, %v465
  %v683 = vadd.f32 %v682, %v468
  %v684 = vadd.f32 %v683, %v470
  %v685 = vadd.f32 %v684, %v473
  %v686 = vadd.f32 %v685, %v475
  %v687 = vadd.f32 %v686, %v478
  %v688 = vadd.f32 %v687, %v480
  %v689 = vadd.f32 %v688, %v483
  %v690 = vadd.f32 %v689, %v485
  %v691 = vadd.f32 %v690, %v488
  %v692 = vadd.f32 %v691, %v490
  %v693 = vadd.f32 %v692, %v493
  %v694 = vadd.f32 %v693, %v495
  %v695 = vadd.f32 %v694, %v498
  %v696 = vadd.f32 %v695, %v500
  %v697 = vadd.f32 %v696, %v503
  %v698 = vadd.f32 %v697, %v505
  %v699 = vrot.slane %v698, 4
  %v700 = vadd.f32 %v698, %v699
  %v701 = vrot.slane %v700, 2
  %v702 = vadd.f32 %v700, %v701
  %v703 = vrot.slane %v702, 1
  %v704 = vadd.f32 %v702, %v703
  %v705 = vmul.f32 %v348, %v348
  %v706 = vmul.f32 %v350, %v350
  %v707 = vmul.f32 %v353, %v353
  %v708 = vmul.f32 %v355, %v355
  %v709 = vmul.f32 %v358, %v358
  %v710 = vmul.f32 %v360, %v360
  %v711 = vmul.f32 %v363, %v363
  %v712 = vmul.f32 %v365, %v365
  %v713 = vmul.f32 %v368, %v368
  %v714 = vmul.f32 %v370, %v370
  %v715 = vmul.f32 %v373, %v373
  %v716 = vmul.f32 %v375, %v375
  %v717 = vmul.f32 %v378, %v378
  %v718 = vmul.f32 %v380, %v380
  %v719 = vmul.f32 %v383, %v383
  %v720 = vmul.f32 %v385, %v385
  %v721 = vmul.f32 %v388, %v388
  %v722 = vmul.f32 %v390, %v390
  %v723 = vmul.f32 %v393, %v393
  %v724 = vmul.f32 %v395, %v395
  %v725 = vmul.f32 %v398, %v398
  %v726 = vmul.f32 %v400, %v400
  %v727 = vmul.f32 %v403, %v403
  %v728 = vmul.f32 %v405, %v405
  %v729 = vmul.f32 %v408, %v408
  %v730 = vmul.f32 %v410, %v410
  %v731 = vmul.f32 %v413, %v413
  %v732 = vmul.f32 %v415, %v415
  %v733 = vmul.f32 %v418, %v418
  %v734 = vmul.f32 %v420, %v420
  %v735 = vmul.f32 %v423, %v423
  %v736 = vmul.f32 %v425, %v425
  %v737 = vmul.f32 %v428, %v428
  %v738 = vmul.f32 %v430, %v430
  %v739 = vmul.f32 %v433, %v433
  %v740 = vmul.f32 %v435, %v435
  %v741 = vmul.f32 %v438, %v438
  %v742 = vmul.f32 %v440, %v440
  %v743 = vmul.f32 %v443, %v443
  %v744 = vmul.f32 %v445, %v445
  %v745 = vmul.f32 %v448, %v448
  %v746 = vmul.f32 %v450, %v450
  %v747 = vmul.f32 %v453, %v453
  %v748 = vmul.f32 %v455, %v455
  %v749 = vmul.f32 %v458, %v458
  %v750 = vmul.f32 %v460, %v460
  %v751 = vmul.f32 %v463, %v463
  %v752 = vmul.f32 %v465, %v465
  %v753 = vmul.f32 %v468, %v468
  %v754 = vmul.f32 %v470, %v470
  %v755 = vmul.f32 %v473, %v473
  %v756 = vmul.f32 %v475, %v475
  %v757 = vmul.f32 %v478, %v478
  %v758 = vmul.f32 %v480, %v480
  %v759 = vmul.f32 %v483, %v483
  %v760 = vmul.f32 %v485, %v485
  %v761 = vmul.f32 %v488, %v488
  %v762 = vmul.f32 %v490, %v490
  %v763 = vmul.f32 %v493, %v493
  %v764 = vmul.f32 %v495, %v495
  %v765 = vmul.f32 %v498, %v498
  %v766 = vmul.f32 %v500, %v500
  %v767 = vmul.f32 %v503, %v503
  %v768 = vmul.f32 %v505, %v505
  %v769 = vadd.f32 %v705, %v706
  %v770 = vadd.f32 %v769, %v707
  %v771 = vadd.f32 %v770, %v708
  %v772 = vadd.f32 %v771, %v709
  %v773 = vadd.f32 %v772, %v710
  %v774 = vadd.f32 %v773, %v711
  %v775 = vadd.f32 %v774, %v712
  %v776 = vadd.f32 %v775, %v713
  %v777 = vadd.f32 %v776, %v714
  %v778 = vadd.f32 %v777, %v715
  %v779 = vadd.f32 %v778, %v716
  %v780 = vadd.f32 %v779, %v717
  %v781 = vadd.f32 %v780, %v718
  %v782 = vadd.f32 %v781, %v719
  %v783 = vadd.f32 %v782, %v720
  %v784 = vadd.f32 %v783, %v721
  %v785 = vadd.f32 %v784, %v722
  %v786 = vadd.f32 %v785, %v723
  %v787 = vadd.f32 %v786, %v724
  %v788 = vadd.f32 %v787, %v725
  %v789 = vadd.f32 %v788, %v726
  %v790 = vadd.f32 %v789, %v727
  %v791 = vadd.f32 %v790, %v728
  %v792 = vadd.f32 %v791, %v729
  %v793 = vadd.f32 %v792, %v730
  %v794 = vadd.f32 %v793, %v731
  %v795 = vadd.f32 %v794, %v732
  %v796 = vadd.f32 %v795, %v733
  %v797 = vadd.f32 %v796, %v734
  %v798 = vadd.f32 %v797, %v735
  %v799 = vadd.f32 %v798, %v736
  %v800 = vadd.f32 %v799, %v737
  %v801 = vadd.f32 %v800, %v738
  %v802 = vadd.f32 %v801, %v739
  %v803 = vadd.f32 %v802, %v740
  %v804 = vadd.f32 %v803, %v741
  %v805 = vadd.f32 %v804, %v742
  %v806 = vadd.f32 %v805, %v743
  %v807 = vadd.f32 %v806, %v744
  %v808 = vadd.f32 %v807, %v745
  %v809 = vadd.f32 %v808, %v746
  %v810 = vadd.f32 %v809, %v747
  %v811 = vadd.f32 %v810, %v748
  %v812 = vadd.f32 %v811, %v749
  %v813 = vadd.f32 %v812, %v750
  %v814 = vadd.f32 %v813, %v751
  %v815 = vadd.f32 %v814, %v752
  %v816 = vadd.f32 %v815, %v753
  %v817 = vadd.f32 %v816, %v754
  %v818 = vadd.f32 %v817, %v755
  %v819 = vadd.f32 %v818, %v756
  %v820 = vadd.f32 %v819, %v757
  %v821 = vadd.f32 %v820, %v758
  %v822 = vadd.f32 %v821, %v759
  %v823 = vadd.f32 %v822, %v760
  %v824 = vadd.f32 %v823, %v761
  %v825 = vadd.f32 %v824, %v762
  %v826 = vadd.f32 %v825, %v763
  %v827 = vadd.f32 %v826, %v764
  %v828 = vadd.f32 %v827, %v765
  %v829 = vadd.f32 %v828, %v766
  %v830 = vadd.f32 %v829, %v767
  %v831 = vadd.f32 %v830, %v768
  %v832 = vrot.slane %v831, 4
  %v833 = vadd.f32 %v831, %v832
  %v834 = vrot.slane %v833, 2
  %v835 = vadd.f32 %v833, %v834
  %v836 = vrot.slane %v835, 1
  %v837 = vadd.f32 %v835, %v836
  %vm838 = vcmask 1040384
  %v839 = vsel %vm838, %v704, %v837
  %v840 = vadd.f32 %v635, %v839
  %841 = vst [vmem:[%s3] sm:$0x3] %v840
  // Predicated region
  $region14: #{_forward.2} parent=0 // pred_check
    _
  $region15: #{_forward.2} parent=0 // pred_check_branch
    %843 = sbr.rel (0) target = $region17
  $region16: #{_forward.2} parent=0 // pred_region
    _
  $region17: #{_forward.2} parent=0 // pred_fallthru
    _
  // Predicated region
  $region18: #{_forward.2} parent=0 // pred_check
    _
  $region19: #{_forward.2} parent=0 // pred_check_branch
    %845 = sbr.rel (0) target = $region21
  $region20: #{_forward.2} parent=0 // pred_region
    _
  $region21: #{_forward.2} parent=0 // pred_fallthru
    _
  // Predicated region
  $region22: #{_forward.2} parent=0 // pred_check
    _
  $region23: #{_forward.2} parent=0 // pred_check_branch
    %847 = sbr.rel (0) target = $region25
  $region24: #{_forward.2} parent=0 // pred_region
    _
  $region25: #{_forward.2} parent=0 // pred_fallthru
    _
  // Predicated region
  $region26: #{_forward.2} parent=0 // pred_check
    _
  $region27: #{_forward.2} parent=0 // pred_check_branch
    %849 = sbr.rel (0) target = $region29
  $region28: #{_forward.2} parent=0 // pred_region
    _
  $region29: #{_forward.2} parent=0 // pred_fallthru
    _

</llo_original>
